<compile_context>
chip_gen: v5e
topology: v5e:2x2
jax: 0.10.0
libtpu: 0.0.40
codegen_flags: <defaults>
</compile_context>

<pallas_src>
import functools
import numpy as np
import jax
import jax.numpy as jnp
from jax.experimental import pallas as pl
from jax.experimental.pallas import tpu as pltpu

LANE = 128


def _round_up(x, m):
    return (x + m - 1) // m * m


# --------------------------- Pallas kernel ----------------------------------

def _vq_kernel(x_ref, e_ref, esq_ref, o_ref):
    """Fused NCHW->tokens transpose + nearest-codebook search + MXU gather.

    x_ref  : (1, C, t)    activation tile in native channel-major layout
    e_ref  : (K_pad, C)   codebook, K zero-padded to a lane multiple
    esq_ref: (1, K_pad)   ||e_k||^2, padded entries = +inf
    o_ref  : (1, t, C)    quantized tokens in flat (N*H*W, C) order
    """
    xt = x_ref[0].T                                        # (t, C)  in-VMEM XLU transpose
    e = e_ref[...]                                         # (K_pad, C)

    # Squared-distance argmin: ||x - e||^2 = ||x||^2 + ||e||^2 - 2 x.e ;
    # the per-row ||x||^2 term is constant and dropped. Contraction over the
    # true D (=C) only -- no padded-D MXU work.
    scores = jax.lax.dot_general(
        xt, e, (((1,), (1,)), ((), ())),
        preferred_element_type=jnp.float32)                # (t, K_pad) on the MXU
    d = esq_ref[...] - 2.0 * scores                        # (t, K_pad); +inf on pad cols

    dmin = jnp.min(d, axis=-1, keepdims=True)              # (t, 1)
    kiota = jax.lax.broadcasted_iota(jnp.int32, d.shape, 1)
    # first index attaining the minimum (matches torch argmin tie-breaking)
    idx = jnp.min(jnp.where(d == dmin, kiota, jnp.int32(d.shape[-1])),
                  axis=-1, keepdims=True)                  # (t, 1)

    onehot = (kiota == idx).astype(jnp.float32)            # (t, K_pad)
    q = jnp.dot(onehot, e, preferred_element_type=jnp.float32)   # (t, C) gather on MXU

    # straight-through arithmetic: forward value = x + (q - x), same float ops as torch
    o_ref[0] = xt + (q - xt)


# --------------------------- wrapper -----------------------------------------

def vector_quantize(x_nchw, embeddings, t_hw=1024):
    """VectorQuantizer.forward(x, training=False) on TPU via a fused Pallas kernel.

    x_nchw:     (N, C, H, W) with C == embedding_dim
    embeddings: (num_embeddings, embedding_dim)
    """
    N, C, H, W = x_nchw.shape
    K, D = embeddings.shape
    assert C == D, "channel dim must equal embedding_dim"
    HW = H * W

    # Lane-dense spatial tile; clamp to the per-batch problem size and keep the grid
    # length >= 2 (two TensorCores on v7x) when possible.
    t = max(LANE, min(_round_up(t_hw, LANE), _round_up(HW, LANE)))
    if N == 1 and HW >= 2 * LANE:
        t = min(t, _round_up(pl.cdiv(HW, 2), LANE))
    HW_pad = _round_up(HW, t)
    K_pad = _round_up(K, LANE)

    # Free reshape -- NO transpose / channel-pad pass over the activation in HBM.
    x3 = x_nchw.reshape(N, C, HW).astype(jnp.float32)
    if HW_pad != HW:
        x3 = jnp.pad(x3, ((0, 0), (0, 0), (0, HW_pad - HW)))

    # Tiny codebook: pad K to a lane multiple only; keep D at its true width.
    e_p = jnp.pad(embeddings.astype(jnp.float32), ((0, K_pad - K), (0, 0)))
    esq = jnp.sum(e_p * e_p, axis=1)[None, :]
    esq = jnp.where(jnp.arange(K_pad)[None, :] < K, esq, jnp.inf)  # pad rows never win

    out = pl.pallas_call(
        _vq_kernel,
        out_shape=jax.ShapeDtypeStruct((N, HW_pad, C), jnp.float32),
        grid=(N, HW_pad // t),
        in_specs=[pl.BlockSpec((1, C, t), lambda n, j: (n, 0, j)),
                  pl.BlockSpec((K_pad, D), lambda n, j: (0, 0)),
                  pl.BlockSpec((1, K_pad), lambda n, j: (0, 0))],
        out_specs=pl.BlockSpec((1, t, C), lambda n, j: (n, j, 0)),
        compiler_params=pltpu.CompilerParams(
            dimension_semantics=("parallel", "parallel")),
    )(x3, e_p, esq)

    if HW_pad != HW:
        out = out[:, :HW, :]
    # The PyTorch module reshapes the (N*H*W, C)-ordered tensor straight into x.shape
    # (N, C, H, W) WITHOUT permuting back -- (N, HW, C) row-major is exactly that flat
    # order, so this reshape is a pure reinterpretation.
    return out.reshape(x_nchw.shape).astype(x_nchw.dtype)


# --------------------------- pure-JAX reference ------------------------------

def reference_forward(x, embeddings):
    N, C, H, W = x.shape
    flat = jnp.transpose(x, (0, 2, 3, 1)).reshape(N, H * W, C)
    # torch.cdist (p=2) + argmin
    diff = flat[:, :, None, :] - embeddings[None, None, :, :]
    dist = jnp.sqrt(jnp.sum(diff * diff, axis=-1))
    idx = jnp.argmin(dist, axis=-1).reshape(-1)
    flat2 = flat.reshape(-1, C)
    q = embeddings[idx]
    q = flat2 + jax.lax.stop_gradient(q - flat2)
    return q.reshape(x.shape)


# --------------------------- main ---------------------------------------------

if __name__ == "__main__":
    N, D, H, W = 2, 32, 16, 16           # embedding_dim = 32, M = 2*16*16 = 512
    K = 64                               # num_embeddings

    k0, k1 = jax.random.split(jax.random.PRNGKey(0))
    # nn.Embedding weight initialized uniform_(-1, 1) in the module
    embeddings = jax.random.uniform(k0, (K, D), jnp.float32, minval=-1.0, maxval=1.0)
    x = jax.random.normal(k1, (N, D, H, W), jnp.float32)

    fwd = jax.jit(functools.partial(vector_quantize, t_hw=1024))
    out = jax.block_until_ready(fwd(x, embeddings))
    assert out.shape == x.shape, out.shape

    ref = jax.block_until_ready(reference_forward(x, embeddings))
    np.testing.assert_allclose(np.asarray(out), np.asarray(ref), rtol=1e-5, atol=1e-6)

    print("KERNEL_OK")
</pallas_src>

<mosaic_0001>
module attributes {stable_mosaic.version = 11 : i64} {
  func.func @_vq_kernel(%arg0: i32, %arg1: i32, %arg2: memref<1x32x256xf32, #tpu.memory_space<vmem>>, %arg3: memref<128x32xf32, #tpu.memory_space<vmem>>, %arg4: memref<1x128xf32, #tpu.memory_space<vmem>>, %arg5: memref<1x256x32xf32, #tpu.memory_space<vmem>>) attributes {dimension_semantics = [#tpu.dimension_semantics<parallel>, #tpu.dimension_semantics<parallel>], iteration_bounds = array<i64: 2, 1>, scalar_prefetch = 0 : i64, scratch_operands = 0 : i64, tpu.core_type = #tpu.core_type<tc>, window_params = [{transform_indices = @transform_0, window_bounds = array<i64: 1, 32, 256>}, {pipeline_mode = #tpu.pipeline_mode<synchronous>, transform_indices = @transform_1, window_bounds = array<i64: 128, 32>}, {pipeline_mode = #tpu.pipeline_mode<synchronous>, transform_indices = @transform_2, window_bounds = array<i64: 1, 128>}, {transform_indices = @transform_3, window_bounds = array<i64: 1, 256, 32>}]} {
    %c0 = arith.constant 0 : index
    %c0_0 = arith.constant 0 : index
    %c0_1 = arith.constant 0 : index
    %0 = vector.load %arg2[%c0, %c0_0, %c0_1] : memref<1x32x256xf32, #tpu.memory_space<vmem>>, vector<1x32x256xf32>
    %1 = vector.shape_cast %0 : vector<1x32x256xf32> to vector<32x256xf32>
    %2 = tpu.transpose %1, [1, 0] : vector<32x256xf32> -> vector<256x32xf32>
    %c0_2 = arith.constant 0 : index
    %c0_3 = arith.constant 0 : index
    %3 = vector.load %arg3[%c0_2, %c0_3] : memref<128x32xf32, #tpu.memory_space<vmem>>, vector<128x32xf32>
    %cst = arith.constant dense<0.000000e+00> : vector<256x128xf32>
    %4 = tpu.matmul %2, %3, %cst {dimension_numbers = #tpu.dot_dimension_numbers<[1], [1], [0], [0], [0, 0, 1, 0], [], []>} : vector<256x32xf32>, vector<128x32xf32>, vector<256x128xf32> -> vector<256x128xf32>
    %c0_4 = arith.constant 0 : index
    %c0_5 = arith.constant 0 : index
    %5 = vector.load %arg4[%c0_4, %c0_5] : memref<1x128xf32, #tpu.memory_space<vmem>>, vector<1x128xf32>
    %cst_6 = arith.constant 2.000000e+00 : f32
    %6 = vector.broadcast %cst_6 : f32 to vector<256x128xf32>
    %7 = arith.mulf %6, %4 : vector<256x128xf32>
    %8 = vector.broadcast %5 : vector<1x128xf32> to vector<256x128xf32>
    %9 = arith.subf %8, %7 : vector<256x128xf32>
    %cst_7 = arith.constant dense<0x7F800000> : vector<256xf32>
    %10 = vector.multi_reduction <minimumf>, %9, %cst_7 [1] : vector<256x128xf32> to vector<256xf32>
    %11 = vector.shape_cast %10 : vector<256xf32> to vector<256x1xf32>
    %12 = tpu.iota {dimensions = array<i32: 1>} : vector<256x128xi32>
    %13 = vector.broadcast %11 : vector<256x1xf32> to vector<256x128xf32>
    %14 = arith.cmpf oeq, %9, %13 : vector<256x128xf32>
    %c128_i32 = arith.constant 128 : i32
    %15 = vector.broadcast %c128_i32 : i32 to vector<256x128xi32>
    %16 = arith.select %14, %12, %15 : vector<256x128xi1>, vector<256x128xi32>
    %cst_8 = arith.constant dense<2147483647> : vector<256xi32>
    %17 = vector.multi_reduction <minsi>, %16, %cst_8 [1] : vector<256x128xi32> to vector<256xi32>
    %18 = vector.shape_cast %17 : vector<256xi32> to vector<256x1xi32>
    %19 = vector.broadcast %18 : vector<256x1xi32> to vector<256x128xi32>
    %20 = arith.cmpi eq, %12, %19 : vector<256x128xi32>
    %21 = arith.extui %20 : vector<256x128xi1> to vector<256x128xi32>
    %22 = arith.sitofp %21 : vector<256x128xi32> to vector<256x128xf32>
    %cst_9 = arith.constant dense<0.000000e+00> : vector<256x32xf32>
    %23 = tpu.matmul %22, %3, %cst_9 {dimension_numbers = #tpu.dot_dimension_numbers<[1], [0], [0], [1], [0, 0, 1, 1], [], []>} : vector<256x128xf32>, vector<128x32xf32>, vector<256x32xf32> -> vector<256x32xf32>
    %24 = arith.subf %23, %2 : vector<256x32xf32>
    %25 = arith.addf %2, %24 : vector<256x32xf32>
    %c0_10 = arith.constant 0 : index
    %c0_11 = arith.constant 0 : index
    %c0_12 = arith.constant 0 : index
    %26 = vector.load %arg5[%c0_10, %c0_11, %c0_12] : memref<1x256x32xf32, #tpu.memory_space<vmem>>, vector<1x256x32xf32>
    %27 = vector.shape_cast %26 : vector<1x256x32xf32> to vector<256x32xf32>
    %28 = vector.shape_cast %25 : vector<256x32xf32> to vector<1x256x32xf32>
    tpu.vector_store %arg5[%c0_10, %c0_11, %c0_12], %28 {strides = array<i32>} : memref<1x256x32xf32, #tpu.memory_space<vmem>>, vector<1x256x32xf32>,
    return
  }
  func.func @transform_0(%arg0: i32, %arg1: i32) -> (i32, i32, i32) {
    %c0_i32 = arith.constant 0 : i32
    %c0_i32_0 = arith.constant 0 : i32
    return %arg0, %c0_i32, %arg1 : i32, i32, i32
  }
  func.func @transform_1(%arg0: i32, %arg1: i32) -> (i32, i32) {
    %c0_i32 = arith.constant 0 : i32
    %c0_i32_0 = arith.constant 0 : i32
    %c0_i32_1 = arith.constant 0 : i32
    return %c0_i32, %c0_i32_0 : i32, i32
  }
  func.func @transform_2(%arg0: i32, %arg1: i32) -> (i32, i32) {
    %c0_i32 = arith.constant 0 : i32
    %c0_i32_0 = arith.constant 0 : i32
    %c0_i32_1 = arith.constant 0 : i32
    return %c0_i32, %c0_i32_0 : i32, i32
  }
  func.func @transform_3(%arg0: i32, %arg1: i32) -> (i32, i32, i32) {
    %c0_i32 = arith.constant 0 : i32
    %c0_i32_0 = arith.constant 0 : i32
    return %arg0, %arg1, %c0_i32 : i32, i32, i32
  }
}

</mosaic_0001>

<llo_original>
// kernel: vector_quantize.1
$region0: #{vector_quantize.1}
  #allocation0 [shape = 'u32[]', space=smem, size = 0x4, offset = 0x4, fixed_abs, tag = 'smem constant byte address 0x4 - core index']
  #allocation1 [shape = 'u32[72,128]{1,0:T(1,128)}', space=vmem, size = 0x9000, scoped, tag = 'internal scratch']
  %s0 = inlined_call_operand.vmem [shape: f32[2,32,256], index: 0, kind: input, shape index: {}]
  %s1 = inlined_call_operand.vmem [shape: f32[128,32], index: 1, kind: input, shape index: {}]
  %s2 = inlined_call_operand.vmem [shape: f32[1,128], index: 2, kind: input, shape index: {}]
  %s3 = inlined_call_operand.vmem [shape: f32[2,256,32], index: 3, kind: output, shape index: {}]
  %s4 = sld [smem:[#allocation0]]
  $region45: #{vector_quantize.1} parent=0
    _
  %s6 = ssub.s32 1, %s4
  %s7 = scalar_select 0, %s6, %s4
  loop: start=0, step=1, limit=4
  $region2: #{vector_quantize.1} parent=0 // loop_pre_header
    _
  $region3: #{vector_quantize.1} parent=0 // loop_header
    %s9 = sphi 0, %s13
    %p10 = scmp.ge.s32.totalorder %s9, 4
    %s16 = sphi 0, %s28
    %s17 = sphi 0, %s24
    %s18 = sphi 0, %s16
    %s19 = sphi 0, %s17
    %s20 = sphi 0, %s18
    %s21 = sphi 0, %s19
    %s33 = sphi 0, %s35
    %s36 = sphi 0, %s33
    %s37 = sphi 0, %s36
    %s53 = sphi 0, %s37
    %s57 = sphi 0, %s57
    %s59 = sphi 0, %s57
    %s60 = sphi 0, %s59
    %s74 = sphi 0, %s60
    %s78 = sphi 0, %s78
    %s80 = sphi 0, %s78
    %s81 = sphi 0, %s80
    %s95 = sphi 0, %s81
    %s103 = sphi 0, %s105
    %s106 = sphi 0, %s103
    %s107 = sphi 0, %s106
    %s123 = sphi 0, %s107
  $region4: #{vector_quantize.1} parent=0 // loop_header_branch
    %12 = sbr.rel (%p10) target = $region8
  $region5: #{vector_quantize.1} parent=0 // loop_body
    %s14 = ssub.s32 %s9, 1
    %s15 = ssub.s32 %s9, 2
    %s22 = sadd.s32 1, %s17
    %p23 = scmp.ge.s32.totalorder %s22, 1
    %s24 = scalar_select %p23, 0, %s22
    %s25 = sadd.s32 1, %s16
    %s26 = scalar_select %p23, %s25, %s16
    %p27 = scmp.ge.s32.totalorder %s26, 2
    %s28 = scalar_select %p27, 0, %s26
    %s29 = ssub.s32 %s16, %s28
    %s30 = ssub.s32 %s17, %s24
    %s31 = sor.u32 %s29, %s30
    %p32 = scmp.eq.s32.totalorder %s31, 0
    %s34 = sadd.s32 %s33, 1
    %s35 = scalar_select %p32, %s33, %s34
    %p38 = pneg %p32
    %p39 = scmp.eq.s32.totalorder %s9, 1
    %p40 = por %p38, %p39
    %p41 = scmp.ne.s32.totalorder %s33, %s36
    %p42 = scmp.eq.s32.totalorder %s9, 0
    %p43 = por %p41, %p42
    %p44 = scmp.ne.s32.totalorder %s33, %s36
    %p45 = scmp.eq.s32.totalorder %s14, 1
    %p46 = por %p44, %p45
    %p47 = scmp.ne.s32.totalorder %s36, %s37
    %p48 = scmp.eq.s32.totalorder %s14, 0
    %p49 = por %p47, %p48
    %p50 = scmp.ne.s32.totalorder %s36, %s37
    %p51 = scmp.eq.s32.totalorder %s15, 1
    %p52 = por %p50, %p51
    %p54 = scmp.ne.s32.totalorder %s37, %s53
    %p55 = scmp.eq.s32.totalorder %s15, 0
    %p56 = por %p54, %p55
    %s58 = sadd.s32 %s57, 1
    %p61 = scmp.eq.s32.totalorder %s9, 1
    %p62 = scmp.ne.s32.totalorder %s57, %s59
    %p63 = scmp.eq.s32.totalorder %s9, 0
    %p64 = por %p62, %p63
    %p65 = scmp.ne.s32.totalorder %s57, %s59
    %p66 = scmp.eq.s32.totalorder %s14, 1
    %p67 = por %p65, %p66
    %p68 = scmp.ne.s32.totalorder %s59, %s60
    %p69 = scmp.eq.s32.totalorder %s14, 0
    %p70 = por %p68, %p69
    %p71 = scmp.ne.s32.totalorder %s59, %s60
    %p72 = scmp.eq.s32.totalorder %s15, 1
    %p73 = por %p71, %p72
    %p75 = scmp.ne.s32.totalorder %s60, %s74
    %p76 = scmp.eq.s32.totalorder %s15, 0
    %p77 = por %p75, %p76
    %s79 = sadd.s32 %s78, 1
    %p82 = scmp.eq.s32.totalorder %s9, 1
    %p83 = scmp.ne.s32.totalorder %s78, %s80
    %p84 = scmp.eq.s32.totalorder %s9, 0
    %p85 = por %p83, %p84
    %p86 = scmp.ne.s32.totalorder %s78, %s80
    %p87 = scmp.eq.s32.totalorder %s14, 1
    %p88 = por %p86, %p87
    %p89 = scmp.ne.s32.totalorder %s80, %s81
    %p90 = scmp.eq.s32.totalorder %s14, 0
    %p91 = por %p89, %p90
    %p92 = scmp.ne.s32.totalorder %s80, %s81
    %p93 = scmp.eq.s32.totalorder %s15, 1
    %p94 = por %p92, %p93
    %p96 = scmp.ne.s32.totalorder %s81, %s95
    %p97 = scmp.eq.s32.totalorder %s15, 0
    %p98 = por %p96, %p97
    %s99 = ssub.s32 %s16, %s28
    %s100 = ssub.s32 %s17, %s24
    %s101 = sor.u32 %s99, %s100
    %p102 = scmp.eq.s32.totalorder %s101, 0
    %s104 = sadd.s32 %s103, 1
    %s105 = scalar_select %p102, %s103, %s104
    %p108 = pneg %p102
    %p109 = scmp.eq.s32.totalorder %s9, 1
    %p110 = por %p108, %p109
    %p111 = scmp.ne.s32.totalorder %s103, %s106
    %p112 = scmp.eq.s32.totalorder %s9, 0
    %p113 = por %p111, %p112
    %p114 = scmp.ne.s32.totalorder %s103, %s106
    %p115 = scmp.eq.s32.totalorder %s14, 1
    %p116 = por %p114, %p115
    %p117 = scmp.ne.s32.totalorder %s106, %s107
    %p118 = scmp.eq.s32.totalorder %s14, 0
    %p119 = por %p117, %p118
    %p120 = scmp.ne.s32.totalorder %s106, %s107
    %p121 = scmp.eq.s32.totalorder %s15, 1
    %p122 = por %p120, %p121
    %p124 = scmp.ne.s32.totalorder %s107, %s123
    %p125 = scmp.eq.s32.totalorder %s15, 0
    %p126 = por %p124, %p125
    %p127 = scmp.le.s32.totalorder 1, %s9
    %p128 = scmp.lt.s32.totalorder %s9, 3
    %p129 = pnand %p127, %p128
    %p130 = pneg %p129
    // Predicated region
    $region9: #{vector_quantize.1} parent=5 // pred_check
      _
    $region10: #{vector_quantize.1} parent=5 // pred_check_branch
      %132 = sbr.rel (%p129) target = $region12
    $region11: #{vector_quantize.1} parent=5 // pred_region
      %s133 = ssub.s32 %s9, 1
      // Predicated region
      $region13: #{vector_quantize.1} parent=11 // pred_check
        %p134 = pneg %p70
      $region14: #{vector_quantize.1} parent=11 // pred_check_branch
        %136 = sbr.rel (%p134) target = $region16
      $region15: #{vector_quantize.1} parent=11 // pred_region
        _
      $region16: #{vector_quantize.1} parent=11 // pred_fallthru
        _
      // Predicated region
      $region17: #{vector_quantize.1} parent=11 // pred_check
        %p137 = pneg %p91
      $region18: #{vector_quantize.1} parent=11 // pred_check_branch
        %139 = sbr.rel (%p137) target = $region20
      $region19: #{vector_quantize.1} parent=11 // pred_region
        _
      $region20: #{vector_quantize.1} parent=11 // pred_fallthru
        _
    $region12: #{vector_quantize.1} parent=5 // pred_fallthru
      _
    %p140 = scmp.lt.s32.totalorder %s9, 2
    // Predicated region
    $region21: #{vector_quantize.1} parent=5 // pred_check
      %p141 = pneg %p140
    $region22: #{vector_quantize.1} parent=5 // pred_check_branch
      %143 = sbr.rel (%p141) target = $region24
    $region23: #{vector_quantize.1} parent=5 // pred_region
      // Predicated region
      $region25: #{vector_quantize.1} parent=23 // pred_check
        %p144 = pneg %p43
      $region26: #{vector_quantize.1} parent=23 // pred_check_branch
        %146 = sbr.rel (%p144) target = $region28
      $region27: #{vector_quantize.1} parent=23 // pred_region
        %s147 = smul.u32 2, %s17
        %p148 = scmp.lt.s32.totalorder %s16, 1
        %s149 = scalar_select %p148, %s16, 1
        %p150 = scmp.lt.s32.totalorder %s147, 1
        %s151 = scalar_select %p150, %s147, 1
        %s152 = smul.addr %s149, 8
        %s153 = sadd.s32 %s151, %s152
        %s154 = smul.addr %s153, 8
        %s155 = scalar_lea.vmem %s0, %s154
        %s156 = smul.u32 2, %s17
      $region28: #{vector_quantize.1} parent=23 // pred_fallthru
        _
    $region24: #{vector_quantize.1} parent=5 // pred_fallthru
      _
    %p157 = scmp.le.s32.totalorder 1, %s9
    %p158 = scmp.lt.s32.totalorder %s9, 3
    %p159 = pnand %p157, %p158
    %p160 = pneg %p159
    // Predicated region
    $region29: #{vector_quantize.1} parent=5 // pred_check
      _
    $region30: #{vector_quantize.1} parent=5 // pred_check_branch
      %162 = sbr.rel (%p159) target = $region32
    $region31: #{vector_quantize.1} parent=5 // pred_region
      %s163 = ssub.s32 %s9, 1
      %s164 = smul.u32 2, %s19
      %p165 = scmp.lt.s32.totalorder %s18, 1
      %s166 = scalar_select %p165, %s18, 1
      %p167 = scmp.lt.s32.totalorder %s164, 1
      %s168 = scalar_select %p167, %s164, 1
      %s169 = smul.addr %s166, 8
      %s170 = sadd.s32 %s168, %s169
      %s171 = smul.addr %s170, 8
      %s172 = scalar_lea.vmem %s0, %s171
      %p173 = pneg %p49
      %p174 = pneg %p46
      %p175 = pneg %p70
      %p176 = pneg %p67
      %p177 = pneg %p91
      %p178 = pneg %p88
      %p179 = pneg %p119
      %p180 = pneg %p116
      %s181 = smul.u32 32, %s19
      %p182 = scmp.lt.s32.totalorder %s18, 1
      %s183 = scalar_select %p182, %s18, 1
      %p184 = scmp.lt.s32.totalorder %s181, 31
      %s185 = scalar_select %p184, %s181, 31
      %s186 = smul.addr %s183, 32
      %s187 = sadd.s32 %s185, %s186
      %s188 = smul.addr %s187, 8
      %s189 = scalar_lea.vmem %s3, %s188
      %s190 = smul.u32 2, %s19
      %p191 = scmp.lt.s32.totalorder %s18, 1
      %s192 = scalar_select %p191, %s18, 1
      %p193 = scmp.lt.s32.totalorder %s190, 1
      %s194 = scalar_select %p193, %s190, 1
      %s195 = smul.addr %s192, 8
      %s196 = sadd.s32 %s194, %s195
      %s197 = smul.addr %s196, 8
      %s198 = scalar_lea.vmem %s0, %s197
      %s199 = smul.u32 2, %s19
      %s200 = smul.u32 32, %s19
      %p201 = scmp.lt.s32.totalorder %s18, 1
      %s202 = scalar_select %p201, %s18, 1
      %p203 = scmp.lt.s32.totalorder %s200, 31
      %s204 = scalar_select %p203, %s200, 31
      %s205 = smul.addr %s202, 32
      %s206 = sadd.s32 %s204, %s205
      %s207 = smul.addr %s206, 8
      %s208 = scalar_lea.vmem %s3, %s207
      %s209 = smul.u32 32, %s19
      %v210 = vld [vmem:[%s198] sm:$0xff]
      %v211 = vld [vmem:[%s198 + $0x8] sm:$0xff]
      %v212 = vld [vmem:[%s198 + $0x10] sm:$0xff]
      %v213 = vld [vmem:[%s198 + $0x18] sm:$0xff]
      %v214 = vld [vmem:[%s198 + $0x20] sm:$0xff]
      %v215 = vld [vmem:[%s198 + $0x28] sm:$0xff]
      %v216 = vld [vmem:[%s198 + $0x30] sm:$0xff]
      %v217 = vld [vmem:[%s198 + $0x38] sm:$0xff]
      %218 = vxpose.xlu0.b32.start [1/16] %v210, 128
      %219 = vxpose.xlu0.b32.cont [2/16] %v212, 128
      %220 = vxpose.xlu0.b32.cont [3/16] %v214, 128
      %221 = vxpose.xlu0.b32.cont [4/16] %v216, 128
      %222 = vxpose.xlu0.b32.cont [5/16] 0.0, 128
      %223 = vxpose.xlu0.b32.cont [6/16] 0.0, 128
      %224 = vxpose.xlu0.b32.cont [7/16] 0.0, 128
      %225 = vxpose.xlu0.b32.cont [8/16] 0.0, 128
      %226 = vxpose.xlu0.b32.cont [9/16] 0.0, 128
      %227 = vxpose.xlu0.b32.cont [10/16] 0.0, 128
      %228 = vxpose.xlu0.b32.cont [11/16] 0.0, 128
      %229 = vxpose.xlu0.b32.cont [12/16] 0.0, 128
      %230 = vxpose.xlu0.b32.cont [13/16] 0.0, 128
      %231 = vxpose.xlu0.b32.cont [14/16] 0.0, 128
      %232 = vxpose.xlu0.b32.cont [15/16] 0.0, 128
      %233 = vxpose.xlu0.b32.end [16/16] 0.0, 128
      %v234 = vpop.trf.xlu0
      %v235 = vpop.trf.xlu0
      %v236 = vpop.trf.xlu0
      %v237 = vpop.trf.xlu0
      %v238 = vpop.trf.xlu0
      %v239 = vpop.trf.xlu0
      %v240 = vpop.trf.xlu0
      %v241 = vpop.trf.xlu0
      %v242 = vpop.trf.xlu0
      %v243 = vpop.trf.xlu0
      %v244 = vpop.trf.xlu0
      %v245 = vpop.trf.xlu0
      %v246 = vpop.trf.xlu0
      %v247 = vpop.trf.xlu0
      %v248 = vpop.trf.xlu0
      %v249 = vpop.trf.xlu0
      %250 = vxpose.xlu0.b32.start [1/16] %v211, 128
      %251 = vxpose.xlu0.b32.cont [2/16] %v213, 128
      %252 = vxpose.xlu0.b32.cont [3/16] %v215, 128
      %253 = vxpose.xlu0.b32.cont [4/16] %v217, 128
      %254 = vxpose.xlu0.b32.cont [5/16] 0.0, 128
      %255 = vxpose.xlu0.b32.cont [6/16] 0.0, 128
      %256 = vxpose.xlu0.b32.cont [7/16] 0.0, 128
      %257 = vxpose.xlu0.b32.cont [8/16] 0.0, 128
      %258 = vxpose.xlu0.b32.cont [9/16] 0.0, 128
      %259 = vxpose.xlu0.b32.cont [10/16] 0.0, 128
      %260 = vxpose.xlu0.b32.cont [11/16] 0.0, 128
      %261 = vxpose.xlu0.b32.cont [12/16] 0.0, 128
      %262 = vxpose.xlu0.b32.cont [13/16] 0.0, 128
      %263 = vxpose.xlu0.b32.cont [14/16] 0.0, 128
      %264 = vxpose.xlu0.b32.cont [15/16] 0.0, 128
      %265 = vxpose.xlu0.b32.end [16/16] 0.0, 128
      %v266 = vpop.trf.xlu0
      %v267 = vpop.trf.xlu0
      %v268 = vpop.trf.xlu0
      %v269 = vpop.trf.xlu0
      %v270 = vpop.trf.xlu0
      %v271 = vpop.trf.xlu0
      %v272 = vpop.trf.xlu0
      %v273 = vpop.trf.xlu0
      %v274 = vpop.trf.xlu0
      %v275 = vpop.trf.xlu0
      %v276 = vpop.trf.xlu0
      %v277 = vpop.trf.xlu0
      %v278 = vpop.trf.xlu0
      %v279 = vpop.trf.xlu0
      %v280 = vpop.trf.xlu0
      %v281 = vpop.trf.xlu0
      %v282 = vld [vmem:[%s1] sm:$0xff]
      %v283 = vld [vmem:[%s1 + $0x8] sm:$0xff]
      %v284 = vld [vmem:[%s1 + $0x10] sm:$0xff]
      %v285 = vld [vmem:[%s1 + $0x18] sm:$0xff]
      %v286 = vld [vmem:[%s1 + $0x20] sm:$0xff]
      %v287 = vld [vmem:[%s1 + $0x28] sm:$0xff]
      %v288 = vld [vmem:[%s1 + $0x30] sm:$0xff]
      %v289 = vld [vmem:[%s1 + $0x38] sm:$0xff]
      %v290 = vld [vmem:[%s1 + $0x40] sm:$0xff]
      %v291 = vld [vmem:[%s1 + $0x48] sm:$0xff]
      %v292 = vld [vmem:[%s1 + $0x50] sm:$0xff]
      %v293 = vld [vmem:[%s1 + $0x58] sm:$0xff]
      %v294 = vld [vmem:[%s1 + $0x60] sm:$0xff]
      %v295 = vld [vmem:[%s1 + $0x68] sm:$0xff]
      %v296 = vld [vmem:[%s1 + $0x70] sm:$0xff]
      %v297 = vld [vmem:[%s1 + $0x78] sm:$0xff]
      %vm298 = vcmask 261120
      %v300 = vsel %vm298, %v234, 0
      %v303 = vsel %vm298, %v235, 0
      %v306 = vsel %vm298, %v236, 0
      %v309 = vsel %vm298, %v237, 0
      %v312 = vsel %vm298, %v238, 0
      %v315 = vsel %vm298, %v239, 0
      %v318 = vsel %vm298, %v240, 0
      %v321 = vsel %vm298, %v241, 0
      %v324 = vsel %vm298, %v242, 0
      %v327 = vsel %vm298, %v243, 0
      %v330 = vsel %vm298, %v244, 0
      %v333 = vsel %vm298, %v245, 0
      %v336 = vsel %vm298, %v246, 0
      %v339 = vsel %vm298, %v247, 0
      %v342 = vsel %vm298, %v248, 0
      %v345 = vsel %vm298, %v249, 0
      %v348 = vsel %vm298, %v266, 0
      %v351 = vsel %vm298, %v267, 0
      %v354 = vsel %vm298, %v268, 0
      %v357 = vsel %vm298, %v269, 0
      %v360 = vsel %vm298, %v270, 0
      %v363 = vsel %vm298, %v271, 0
      %v366 = vsel %vm298, %v272, 0
      %v369 = vsel %vm298, %v273, 0
      %v372 = vsel %vm298, %v274, 0
      %v375 = vsel %vm298, %v275, 0
      %v378 = vsel %vm298, %v276, 0
      %v381 = vsel %vm298, %v277, 0
      %v384 = vsel %vm298, %v278, 0
      %v387 = vsel %vm298, %v279, 0
      %v390 = vsel %vm298, %v280, 0
      %v393 = vsel %vm298, %v281, 0
      %v396 = vsel %vm298, %v282, 0
      %v399 = vsel %vm298, %v283, 0
      %v402 = vsel %vm298, %v284, 0
      %v405 = vsel %vm298, %v285, 0
      %v408 = vsel %vm298, %v286, 0
      %v411 = vsel %vm298, %v287, 0
      %v414 = vsel %vm298, %v288, 0
      %v417 = vsel %vm298, %v289, 0
      %v420 = vsel %vm298, %v290, 0
      %v423 = vsel %vm298, %v291, 0
      %v426 = vsel %vm298, %v292, 0
      %v429 = vsel %vm298, %v293, 0
      %v432 = vsel %vm298, %v294, 0
      %v435 = vsel %vm298, %v295, 0
      %v438 = vsel %vm298, %v296, 0
      %v441 = vsel %vm298, %v297, 0
      %443 = vmatpush.xpose.msra.mxu0 %v441
      %444 = vmatpush.xpose.msra.mxu0 %v438
      %445 = vmatpush.xpose.msra.mxu0 %v435
      %446 = vmatpush.xpose.msra.mxu0 %v432
      %447 = vmatpush.xpose.msra.mxu0 %v429
      %448 = vmatpush.xpose.msra.mxu0 %v426
      %449 = vmatpush.xpose.msra.mxu0 %v423
      %450 = vmatpush.xpose.msra.mxu0 %v420
      %451 = vmatpush.xpose.msra.mxu0 %v417
      %452 = vmatpush.xpose.msra.mxu0 %v414
      %453 = vmatpush.xpose.msra.mxu0 %v411
      %454 = vmatpush.xpose.msra.mxu0 %v408
      %455 = vmatpush.xpose.msra.mxu0 %v405
      %456 = vmatpush.xpose.msra.mxu0 %v402
      %457 = vmatpush.xpose.msra.mxu0 %v399
      %458 = vmatpush.xpose.msra.mxu0 %v396
      %459 = vmatmul.f32.gmra.mxu0 %v300
      %v460 = vpop.f32.mrf.mxu0
      %v461 = vadd.f32 0.0, %v460
      %462 = vmatmul.f32.gmra.mxu0 %v303
      %v463 = vpop.f32.mrf.mxu0
      %v464 = vadd.f32 0.0, %v463
      %465 = vmatmul.f32.gmra.mxu0 %v306
      %v466 = vpop.f32.mrf.mxu0
      %v467 = vadd.f32 0.0, %v466
      %468 = vmatmul.f32.gmra.mxu0 %v309
      %v469 = vpop.f32.mrf.mxu0
      %v470 = vadd.f32 0.0, %v469
      %471 = vmatmul.f32.gmra.mxu0 %v312
      %v472 = vpop.f32.mrf.mxu0
      %v473 = vadd.f32 0.0, %v472
      %474 = vmatmul.f32.gmra.mxu0 %v315
      %v475 = vpop.f32.mrf.mxu0
      %v476 = vadd.f32 0.0, %v475
      %477 = vmatmul.f32.gmra.mxu0 %v318
      %v478 = vpop.f32.mrf.mxu0
      %v479 = vadd.f32 0.0, %v478
      %480 = vmatmul.f32.gmra.mxu0 %v321
      %v481 = vpop.f32.mrf.mxu0
      %v482 = vadd.f32 0.0, %v481
      %483 = vmatmul.f32.gmra.mxu0 %v324
      %v484 = vpop.f32.mrf.mxu0
      %v485 = vadd.f32 0.0, %v484
      %486 = vmatmul.f32.gmra.mxu0 %v327
      %v487 = vpop.f32.mrf.mxu0
      %v488 = vadd.f32 0.0, %v487
      %489 = vmatmul.f32.gmra.mxu0 %v330
      %v490 = vpop.f32.mrf.mxu0
      %v491 = vadd.f32 0.0, %v490
      %492 = vmatmul.f32.gmra.mxu0 %v333
      %v493 = vpop.f32.mrf.mxu0
      %v494 = vadd.f32 0.0, %v493
      %495 = vmatmul.f32.gmra.mxu0 %v336
      %v496 = vpop.f32.mrf.mxu0
      %v497 = vadd.f32 0.0, %v496
      %498 = vmatmul.f32.gmra.mxu0 %v339
      %v499 = vpop.f32.mrf.mxu0
      %v500 = vadd.f32 0.0, %v499
      %501 = vmatmul.f32.gmra.mxu0 %v342
      %v502 = vpop.f32.mrf.mxu0
      %v503 = vadd.f32 0.0, %v502
      %504 = vmatmul.f32.gmra.mxu0 %v345
      %v505 = vpop.f32.mrf.mxu0
      %v506 = vadd.f32 0.0, %v505
      %507 = vmatmul.f32.gmra.mxu0 %v348
      %v508 = vpop.f32.mrf.mxu0
      %v509 = vadd.f32 0.0, %v508
      %510 = vmatmul.f32.gmra.mxu0 %v351
      %v511 = vpop.f32.mrf.mxu0
      %v512 = vadd.f32 0.0, %v511
      %513 = vmatmul.f32.gmra.mxu0 %v354
      %v514 = vpop.f32.mrf.mxu0
      %v515 = vadd.f32 0.0, %v514
      %516 = vmatmul.f32.gmra.mxu0 %v357
      %v517 = vpop.f32.mrf.mxu0
      %v518 = vadd.f32 0.0, %v517
      %519 = vmatmul.f32.gmra.mxu0 %v360
      %v520 = vpop.f32.mrf.mxu0
      %v521 = vadd.f32 0.0, %v520
      %522 = vmatmul.f32.gmra.mxu0 %v363
      %v523 = vpop.f32.mrf.mxu0
      %v524 = vadd.f32 0.0, %v523
      %525 = vmatmul.f32.gmra.mxu0 %v366
      %v526 = vpop.f32.mrf.mxu0
      %v527 = vadd.f32 0.0, %v526
      %528 = vmatmul.f32.gmra.mxu0 %v369
      %v529 = vpop.f32.mrf.mxu0
      %v530 = vadd.f32 0.0, %v529
      %531 = vmatmul.f32.gmra.mxu0 %v372
      %v532 = vpop.f32.mrf.mxu0
      %v533 = vadd.f32 0.0, %v532
      %534 = vmatmul.f32.gmra.mxu0 %v375
      %v535 = vpop.f32.mrf.mxu0
      %v536 = vadd.f32 0.0, %v535
      %537 = vmatmul.f32.gmra.mxu0 %v378
      %v538 = vpop.f32.mrf.mxu0
      %v539 = vadd.f32 0.0, %v538
      %540 = vmatmul.f32.gmra.mxu0 %v381
      %v541 = vpop.f32.mrf.mxu0
      %v542 = vadd.f32 0.0, %v541
      %543 = vmatmul.f32.gmra.mxu0 %v384
      %v544 = vpop.f32.mrf.mxu0
      %v545 = vadd.f32 0.0, %v544
      %546 = vmatmul.f32.gmra.mxu0 %v387
      %v547 = vpop.f32.mrf.mxu0
      %v548 = vadd.f32 0.0, %v547
      %549 = vmatmul.f32.gmra.mxu0 %v390
      %v550 = vpop.f32.mrf.mxu0
      %v551 = vadd.f32 0.0, %v550
      %552 = vmatmul.f32.gmra.mxu0 %v393
      %v553 = vpop.f32.mrf.mxu0
      %v554 = vadd.f32 0.0, %v553
      %555 = vdwg.mxu0
      %v556 = vld [vmem:[%s2] sm:$0x1]
      %v557 = vmul.f32 %v461, 2.0
      %v558 = vmul.f32 %v464, 2.0
      %v559 = vmul.f32 %v467, 2.0
      %v560 = vmul.f32 %v470, 2.0
      %v561 = vmul.f32 %v473, 2.0
      %v562 = vmul.f32 %v476, 2.0
      %v563 = vmul.f32 %v479, 2.0
      %v564 = vmul.f32 %v482, 2.0
      %v565 = vmul.f32 %v485, 2.0
      %v566 = vmul.f32 %v488, 2.0
      %v567 = vmul.f32 %v491, 2.0
      %v568 = vmul.f32 %v494, 2.0
      %v569 = vmul.f32 %v497, 2.0
      %v570 = vmul.f32 %v500, 2.0
      %v571 = vmul.f32 %v503, 2.0
      %v572 = vmul.f32 %v506, 2.0
      %v573 = vmul.f32 %v509, 2.0
      %v574 = vmul.f32 %v512, 2.0
      %v575 = vmul.f32 %v515, 2.0
      %v576 = vmul.f32 %v518, 2.0
      %v577 = vmul.f32 %v521, 2.0
      %v578 = vmul.f32 %v524, 2.0
      %v579 = vmul.f32 %v527, 2.0
      %v580 = vmul.f32 %v530, 2.0
      %v581 = vmul.f32 %v533, 2.0
      %v582 = vmul.f32 %v536, 2.0
      %v583 = vmul.f32 %v539, 2.0
      %v584 = vmul.f32 %v542, 2.0
      %v585 = vmul.f32 %v545, 2.0
      %v586 = vmul.f32 %v548, 2.0
      %v587 = vmul.f32 %v551, 2.0
      %v588 = vmul.f32 %v554, 2.0
      %v590 = vperm.slane %v556, 0
      %v592 = vsub.f32 %v590, %v557
      %v593 = vsub.f32 %v590, %v558
      %v594 = vsub.f32 %v590, %v559
      %v595 = vsub.f32 %v590, %v560
      %v596 = vsub.f32 %v590, %v561
      %v597 = vsub.f32 %v590, %v562
      %v598 = vsub.f32 %v590, %v563
      %v599 = vsub.f32 %v590, %v564
      %v600 = vsub.f32 %v590, %v565
      %v601 = vsub.f32 %v590, %v566
      %v602 = vsub.f32 %v590, %v567
      %v603 = vsub.f32 %v590, %v568
      %v604 = vsub.f32 %v590, %v569
      %v605 = vsub.f32 %v590, %v570
      %v606 = vsub.f32 %v590, %v571
      %v607 = vsub.f32 %v590, %v572
      %v608 = vsub.f32 %v590, %v573
      %v609 = vsub.f32 %v590, %v574
      %v610 = vsub.f32 %v590, %v575
      %v611 = vsub.f32 %v590, %v576
      %v612 = vsub.f32 %v590, %v577
      %v613 = vsub.f32 %v590, %v578
      %v614 = vsub.f32 %v590, %v579
      %v615 = vsub.f32 %v590, %v580
      %v616 = vsub.f32 %v590, %v581
      %v617 = vsub.f32 %v590, %v582
      %v618 = vsub.f32 %v590, %v583
      %v619 = vsub.f32 %v590, %v584
      %v620 = vsub.f32 %v590, %v585
      %v621 = vsub.f32 %v590, %v586
      %v622 = vsub.f32 %v590, %v587
      %v623 = vsub.f32 %v590, %v588
      %624 = vmin.xlane.f32.xlu0 %v592
      %v625 = vpop.xlane.xlu0 %624
      %626 = vmin.xlane.f32.xlu0 %v593
      %v627 = vpop.xlane.xlu0 %626
      %628 = vmin.xlane.f32.xlu0 %v594
      %v629 = vpop.xlane.xlu0 %628
      %630 = vmin.xlane.f32.xlu0 %v595
      %v631 = vpop.xlane.xlu0 %630
      %632 = vmin.xlane.f32.xlu0 %v596
      %v633 = vpop.xlane.xlu0 %632
      %634 = vmin.xlane.f32.xlu0 %v597
      %v635 = vpop.xlane.xlu0 %634
      %636 = vmin.xlane.f32.xlu0 %v598
      %v637 = vpop.xlane.xlu0 %636
      %638 = vmin.xlane.f32.xlu0 %v599
      %v639 = vpop.xlane.xlu0 %638
      %640 = vmin.xlane.f32.xlu0 %v600
      %v641 = vpop.xlane.xlu0 %640
      %642 = vmin.xlane.f32.xlu0 %v601
      %v643 = vpop.xlane.xlu0 %642
      %644 = vmin.xlane.f32.xlu0 %v602
      %v645 = vpop.xlane.xlu0 %644
      %646 = vmin.xlane.f32.xlu0 %v603
      %v647 = vpop.xlane.xlu0 %646
      %648 = vmin.xlane.f32.xlu0 %v604
      %v649 = vpop.xlane.xlu0 %648
      %650 = vmin.xlane.f32.xlu0 %v605
      %v651 = vpop.xlane.xlu0 %650
      %652 = vmin.xlane.f32.xlu0 %v606
      %v653 = vpop.xlane.xlu0 %652
      %654 = vmin.xlane.f32.xlu0 %v607
      %v655 = vpop.xlane.xlu0 %654
      %656 = vmin.xlane.f32.xlu0 %v608
      %v657 = vpop.xlane.xlu0 %656
      %658 = vmin.xlane.f32.xlu0 %v609
      %v659 = vpop.xlane.xlu0 %658
      %660 = vmin.xlane.f32.xlu0 %v610
      %v661 = vpop.xlane.xlu0 %660
      %662 = vmin.xlane.f32.xlu0 %v611
      %v663 = vpop.xlane.xlu0 %662
      %664 = vmin.xlane.f32.xlu0 %v612
      %v665 = vpop.xlane.xlu0 %664
      %666 = vmin.xlane.f32.xlu0 %v613
      %v667 = vpop.xlane.xlu0 %666
      %668 = vmin.xlane.f32.xlu0 %v614
      %v669 = vpop.xlane.xlu0 %668
      %670 = vmin.xlane.f32.xlu0 %v615
      %v671 = vpop.xlane.xlu0 %670
      %672 = vmin.xlane.f32.xlu0 %v616
      %v673 = vpop.xlane.xlu0 %672
      %674 = vmin.xlane.f32.xlu0 %v617
      %v675 = vpop.xlane.xlu0 %674
      %676 = vmin.xlane.f32.xlu0 %v618
      %v677 = vpop.xlane.xlu0 %676
      %678 = vmin.xlane.f32.xlu0 %v619
      %v679 = vpop.xlane.xlu0 %678
      %680 = vmin.xlane.f32.xlu0 %v620
      %v681 = vpop.xlane.xlu0 %680
      %682 = vmin.xlane.f32.xlu0 %v621
      %v683 = vpop.xlane.xlu0 %682
      %684 = vmin.xlane.f32.xlu0 %v622
      %v685 = vpop.xlane.xlu0 %684
      %686 = vmin.xlane.f32.xlu0 %v623
      %v687 = vpop.xlane.xlu0 %686
      %v688 = vlaneseq
      %v689 = vand.u32 %v688, 127
      %vm690 = vcmp.eq.f32.partialorder %v592, %v625
      %vm691 = vcmp.eq.f32.partialorder %v593, %v627
      %vm692 = vcmp.eq.f32.partialorder %v594, %v629
      %vm693 = vcmp.eq.f32.partialorder %v595, %v631
      %vm694 = vcmp.eq.f32.partialorder %v596, %v633
      %vm695 = vcmp.eq.f32.partialorder %v597, %v635
      %vm696 = vcmp.eq.f32.partialorder %v598, %v637
      %vm697 = vcmp.eq.f32.partialorder %v599, %v639
      %vm698 = vcmp.eq.f32.partialorder %v600, %v641
      %vm699 = vcmp.eq.f32.partialorder %v601, %v643
      %vm700 = vcmp.eq.f32.partialorder %v602, %v645
      %vm701 = vcmp.eq.f32.partialorder %v603, %v647
      %vm702 = vcmp.eq.f32.partialorder %v604, %v649
      %vm703 = vcmp.eq.f32.partialorder %v605, %v651
      %vm704 = vcmp.eq.f32.partialorder %v606, %v653
      %vm705 = vcmp.eq.f32.partialorder %v607, %v655
      %vm706 = vcmp.eq.f32.partialorder %v608, %v657
      %vm707 = vcmp.eq.f32.partialorder %v609, %v659
      %vm708 = vcmp.eq.f32.partialorder %v610, %v661
      %vm709 = vcmp.eq.f32.partialorder %v611, %v663
      %vm710 = vcmp.eq.f32.partialorder %v612, %v665
      %vm711 = vcmp.eq.f32.partialorder %v613, %v667
      %vm712 = vcmp.eq.f32.partialorder %v614, %v669
      %vm713 = vcmp.eq.f32.partialorder %v615, %v671
      %vm714 = vcmp.eq.f32.partialorder %v616, %v673
      %vm715 = vcmp.eq.f32.partialorder %v617, %v675
      %vm716 = vcmp.eq.f32.partialorder %v618, %v677
      %vm717 = vcmp.eq.f32.partialorder %v619, %v679
      %vm718 = vcmp.eq.f32.partialorder %v620, %v681
      %vm719 = vcmp.eq.f32.partialorder %v621, %v683
      %vm720 = vcmp.eq.f32.partialorder %v622, %v685
      %vm721 = vcmp.eq.f32.partialorder %v623, %v687
      %v722 = vsel %vm690, %v689, 128
      %v723 = vsel %vm691, %v689, 128
      %v724 = vsel %vm692, %v689, 128
      %v725 = vsel %vm693, %v689, 128
      %v726 = vsel %vm694, %v689, 128
      %v727 = vsel %vm695, %v689, 128
      %v728 = vsel %vm696, %v689, 128
      %v729 = vsel %vm697, %v689, 128
      %v730 = vsel %vm698, %v689, 128
      %v731 = vsel %vm699, %v689, 128
      %v732 = vsel %vm700, %v689, 128
      %v733 = vsel %vm701, %v689, 128
      %v734 = vsel %vm702, %v689, 128
      %v735 = vsel %vm703, %v689, 128
      %v736 = vsel %vm704, %v689, 128
      %v737 = vsel %vm705, %v689, 128
      %v738 = vsel %vm706, %v689, 128
      %v739 = vsel %vm707, %v689, 128
      %v740 = vsel %vm708, %v689, 128
      %v741 = vsel %vm709, %v689, 128
      %v742 = vsel %vm710, %v689, 128
      %v743 = vsel %vm711, %v689, 128
      %v744 = vsel %vm712, %v689, 128
      %v745 = vsel %vm713, %v689, 128
      %v746 = vsel %vm714, %v689, 128
      %v747 = vsel %vm715, %v689, 128
      %v748 = vsel %vm716, %v689, 128
      %v749 = vsel %vm717, %v689, 128
      %v750 = vsel %vm718, %v689, 128
      %v751 = vsel %vm719, %v689, 128
      %v752 = vsel %vm720, %v689, 128
      %v753 = vsel %vm721, %v689, 128
      %v754 = vand.u32 %v722, 65535
      %v755 = vshra.s32 %v722, 16
      %v756 = vcvt.s32.f32 %v754
      %v757 = vcvt.s32.f32 %v755
      %758 = vmin.xlane.f32.xlu0 %v757
      %v759 = vpop.xlane.xlu0 %758
      %vm760 = vcmp.eq.f32.partialorder %v757, %v759
      %v761 = vsel %vm760, %v756, inf
      %762 = vmin.xlane.f32.xlu0 %v761
      %v763 = vpop.xlane.xlu0 %762
      %v764 = vcvt.f32.s32 %v763
      %v765 = vcvt.f32.s32 %v759
      %v766 = vshll.u32 %v765, 16
      %v767 = vadd.s32 %v766, %v764
      %v768 = vand.u32 %v723, 65535
      %v769 = vshra.s32 %v723, 16
      %v770 = vcvt.s32.f32 %v768
      %v771 = vcvt.s32.f32 %v769
      %772 = vmin.xlane.f32.xlu0 %v771
      %v773 = vpop.xlane.xlu0 %772
      %vm774 = vcmp.eq.f32.partialorder %v771, %v773
      %v775 = vsel %vm774, %v770, inf
      %776 = vmin.xlane.f32.xlu0 %v775
      %v777 = vpop.xlane.xlu0 %776
      %v778 = vcvt.f32.s32 %v777
      %v779 = vcvt.f32.s32 %v773
      %v780 = vshll.u32 %v779, 16
      %v781 = vadd.s32 %v780, %v778
      %v782 = vand.u32 %v724, 65535
      %v783 = vshra.s32 %v724, 16
      %v784 = vcvt.s32.f32 %v782
      %v785 = vcvt.s32.f32 %v783
      %786 = vmin.xlane.f32.xlu0 %v785
      %v787 = vpop.xlane.xlu0 %786
      %vm788 = vcmp.eq.f32.partialorder %v785, %v787
      %v789 = vsel %vm788, %v784, inf
      %790 = vmin.xlane.f32.xlu0 %v789
      %v791 = vpop.xlane.xlu0 %790
      %v792 = vcvt.f32.s32 %v791
      %v793 = vcvt.f32.s32 %v787
      %v794 = vshll.u32 %v793, 16
      %v795 = vadd.s32 %v794, %v792
      %v796 = vand.u32 %v725, 65535
      %v797 = vshra.s32 %v725, 16
      %v798 = vcvt.s32.f32 %v796
      %v799 = vcvt.s32.f32 %v797
      %800 = vmin.xlane.f32.xlu0 %v799
      %v801 = vpop.xlane.xlu0 %800
      %vm802 = vcmp.eq.f32.partialorder %v799, %v801
      %v803 = vsel %vm802, %v798, inf
      %804 = vmin.xlane.f32.xlu0 %v803
      %v805 = vpop.xlane.xlu0 %804
      %v806 = vcvt.f32.s32 %v805
      %v807 = vcvt.f32.s32 %v801
      %v808 = vshll.u32 %v807, 16
      %v809 = vadd.s32 %v808, %v806
      %v810 = vand.u32 %v726, 65535
      %v811 = vshra.s32 %v726, 16
      %v812 = vcvt.s32.f32 %v810
      %v813 = vcvt.s32.f32 %v811
      %814 = vmin.xlane.f32.xlu0 %v813
      %v815 = vpop.xlane.xlu0 %814
      %vm816 = vcmp.eq.f32.partialorder %v813, %v815
      %v817 = vsel %vm816, %v812, inf
      %818 = vmin.xlane.f32.xlu0 %v817
      %v819 = vpop.xlane.xlu0 %818
      %v820 = vcvt.f32.s32 %v819
      %v821 = vcvt.f32.s32 %v815
      %v822 = vshll.u32 %v821, 16
      %v823 = vadd.s32 %v822, %v820
      %v824 = vand.u32 %v727, 65535
      %v825 = vshra.s32 %v727, 16
      %v826 = vcvt.s32.f32 %v824
      %v827 = vcvt.s32.f32 %v825
      %828 = vmin.xlane.f32.xlu0 %v827
      %v829 = vpop.xlane.xlu0 %828
      %vm830 = vcmp.eq.f32.partialorder %v827, %v829
      %v831 = vsel %vm830, %v826, inf
      %832 = vmin.xlane.f32.xlu0 %v831
      %v833 = vpop.xlane.xlu0 %832
      %v834 = vcvt.f32.s32 %v833
      %v835 = vcvt.f32.s32 %v829
      %v836 = vshll.u32 %v835, 16
      %v837 = vadd.s32 %v836, %v834
      %v838 = vand.u32 %v728, 65535
      %v839 = vshra.s32 %v728, 16
      %v840 = vcvt.s32.f32 %v838
      %v841 = vcvt.s32.f32 %v839
      %842 = vmin.xlane.f32.xlu0 %v841
      %v843 = vpop.xlane.xlu0 %842
      %vm844 = vcmp.eq.f32.partialorder %v841, %v843
      %v845 = vsel %vm844, %v840, inf
      %846 = vmin.xlane.f32.xlu0 %v845
      %v847 = vpop.xlane.xlu0 %846
      %v848 = vcvt.f32.s32 %v847
      %v849 = vcvt.f32.s32 %v843
      %v850 = vshll.u32 %v849, 16
      %v851 = vadd.s32 %v850, %v848
      %v852 = vand.u32 %v729, 65535
      %v853 = vshra.s32 %v729, 16
      %v854 = vcvt.s32.f32 %v852
      %v855 = vcvt.s32.f32 %v853
      %856 = vmin.xlane.f32.xlu0 %v855
      %v857 = vpop.xlane.xlu0 %856
      %vm858 = vcmp.eq.f32.partialorder %v855, %v857
      %v859 = vsel %vm858, %v854, inf
      %860 = vmin.xlane.f32.xlu0 %v859
      %v861 = vpop.xlane.xlu0 %860
      %v862 = vcvt.f32.s32 %v861
      %v863 = vcvt.f32.s32 %v857
      %v864 = vshll.u32 %v863, 16
      %v865 = vadd.s32 %v864, %v862
      %v866 = vand.u32 %v730, 65535
      %v867 = vshra.s32 %v730, 16
      %v868 = vcvt.s32.f32 %v866
      %v869 = vcvt.s32.f32 %v867
      %870 = vmin.xlane.f32.xlu0 %v869
      %v871 = vpop.xlane.xlu0 %870
      %vm872 = vcmp.eq.f32.partialorder %v869, %v871
      %v873 = vsel %vm872, %v868, inf
      %874 = vmin.xlane.f32.xlu0 %v873
      %v875 = vpop.xlane.xlu0 %874
      %v876 = vcvt.f32.s32 %v875
      %v877 = vcvt.f32.s32 %v871
      %v878 = vshll.u32 %v877, 16
      %v879 = vadd.s32 %v878, %v876
      %v880 = vand.u32 %v731, 65535
      %v881 = vshra.s32 %v731, 16
      %v882 = vcvt.s32.f32 %v880
      %v883 = vcvt.s32.f32 %v881
      %884 = vmin.xlane.f32.xlu0 %v883
      %v885 = vpop.xlane.xlu0 %884
      %vm886 = vcmp.eq.f32.partialorder %v883, %v885
      %v887 = vsel %vm886, %v882, inf
      %888 = vmin.xlane.f32.xlu0 %v887
      %v889 = vpop.xlane.xlu0 %888
      %v890 = vcvt.f32.s32 %v889
      %v891 = vcvt.f32.s32 %v885
      %v892 = vshll.u32 %v891, 16
      %v893 = vadd.s32 %v892, %v890
      %v894 = vand.u32 %v732, 65535
      %v895 = vshra.s32 %v732, 16
      %v896 = vcvt.s32.f32 %v894
      %v897 = vcvt.s32.f32 %v895
      %898 = vmin.xlane.f32.xlu0 %v897
      %v899 = vpop.xlane.xlu0 %898
      %vm900 = vcmp.eq.f32.partialorder %v897, %v899
      %v901 = vsel %vm900, %v896, inf
      %902 = vmin.xlane.f32.xlu0 %v901
      %v903 = vpop.xlane.xlu0 %902
      %v904 = vcvt.f32.s32 %v903
      %v905 = vcvt.f32.s32 %v899
      %v906 = vshll.u32 %v905, 16
      %v907 = vadd.s32 %v906, %v904
      %v908 = vand.u32 %v733, 65535
      %v909 = vshra.s32 %v733, 16
      %v910 = vcvt.s32.f32 %v908
      %v911 = vcvt.s32.f32 %v909
      %912 = vmin.xlane.f32.xlu0 %v911
      %v913 = vpop.xlane.xlu0 %912
      %vm914 = vcmp.eq.f32.partialorder %v911, %v913
      %v915 = vsel %vm914, %v910, inf
      %916 = vmin.xlane.f32.xlu0 %v915
      %v917 = vpop.xlane.xlu0 %916
      %v918 = vcvt.f32.s32 %v917
      %v919 = vcvt.f32.s32 %v913
      %v920 = vshll.u32 %v919, 16
      %v921 = vadd.s32 %v920, %v918
      %v922 = vand.u32 %v734, 65535
      %v923 = vshra.s32 %v734, 16
      %v924 = vcvt.s32.f32 %v922
      %v925 = vcvt.s32.f32 %v923
      %926 = vmin.xlane.f32.xlu0 %v925
      %v927 = vpop.xlane.xlu0 %926
      %vm928 = vcmp.eq.f32.partialorder %v925, %v927
      %v929 = vsel %vm928, %v924, inf
      %930 = vmin.xlane.f32.xlu0 %v929
      %v931 = vpop.xlane.xlu0 %930
      %v932 = vcvt.f32.s32 %v931
      %v933 = vcvt.f32.s32 %v927
      %v934 = vshll.u32 %v933, 16
      %v935 = vadd.s32 %v934, %v932
      %v936 = vand.u32 %v735, 65535
      %v937 = vshra.s32 %v735, 16
      %v938 = vcvt.s32.f32 %v936
      %v939 = vcvt.s32.f32 %v937
      %940 = vmin.xlane.f32.xlu0 %v939
      %v941 = vpop.xlane.xlu0 %940
      %vm942 = vcmp.eq.f32.partialorder %v939, %v941
      %v943 = vsel %vm942, %v938, inf
      %944 = vmin.xlane.f32.xlu0 %v943
      %v945 = vpop.xlane.xlu0 %944
      %v946 = vcvt.f32.s32 %v945
      %v947 = vcvt.f32.s32 %v941
      %v948 = vshll.u32 %v947, 16
      %v949 = vadd.s32 %v948, %v946
      %v950 = vand.u32 %v736, 65535
      %v951 = vshra.s32 %v736, 16
      %v952 = vcvt.s32.f32 %v950
      %v953 = vcvt.s32.f32 %v951
      %954 = vmin.xlane.f32.xlu0 %v953
      %v955 = vpop.xlane.xlu0 %954
      %vm956 = vcmp.eq.f32.partialorder %v953, %v955
      %v957 = vsel %vm956, %v952, inf
      %958 = vmin.xlane.f32.xlu0 %v957
      %v959 = vpop.xlane.xlu0 %958
      %v960 = vcvt.f32.s32 %v959
      %v961 = vcvt.f32.s32 %v955
      %v962 = vshll.u32 %v961, 16
      %v963 = vadd.s32 %v962, %v960
      %v964 = vand.u32 %v737, 65535
      %v965 = vshra.s32 %v737, 16
      %v966 = vcvt.s32.f32 %v964
      %v967 = vcvt.s32.f32 %v965
      %968 = vmin.xlane.f32.xlu0 %v967
      %v969 = vpop.xlane.xlu0 %968
      %vm970 = vcmp.eq.f32.partialorder %v967, %v969
      %v971 = vsel %vm970, %v966, inf
      %972 = vmin.xlane.f32.xlu0 %v971
      %v973 = vpop.xlane.xlu0 %972
      %v974 = vcvt.f32.s32 %v973
      %v975 = vcvt.f32.s32 %v969
      %v976 = vshll.u32 %v975, 16
      %v977 = vadd.s32 %v976, %v974
      %v978 = vand.u32 %v738, 65535
      %v979 = vshra.s32 %v738, 16
      %v980 = vcvt.s32.f32 %v978
      %v981 = vcvt.s32.f32 %v979
      %982 = vmin.xlane.f32.xlu0 %v981
      %v983 = vpop.xlane.xlu0 %982
      %vm984 = vcmp.eq.f32.partialorder %v981, %v983
      %v985 = vsel %vm984, %v980, inf
      %986 = vmin.xlane.f32.xlu0 %v985
      %v987 = vpop.xlane.xlu0 %986
      %v988 = vcvt.f32.s32 %v987
      %v989 = vcvt.f32.s32 %v983
      %v990 = vshll.u32 %v989, 16
      %v991 = vadd.s32 %v990, %v988
      %v992 = vand.u32 %v739, 65535
      %v993 = vshra.s32 %v739, 16
      %v994 = vcvt.s32.f32 %v992
      %v995 = vcvt.s32.f32 %v993
      %996 = vmin.xlane.f32.xlu0 %v995
      %v997 = vpop.xlane.xlu0 %996
      %vm998 = vcmp.eq.f32.partialorder %v995, %v997
      %v999 = vsel %vm998, %v994, inf
      %1000 = vmin.xlane.f32.xlu0 %v999
      %v1001 = vpop.xlane.xlu0 %1000
      %v1002 = vcvt.f32.s32 %v1001
      %v1003 = vcvt.f32.s32 %v997
      %v1004 = vshll.u32 %v1003, 16
      %v1005 = vadd.s32 %v1004, %v1002
      %v1006 = vand.u32 %v740, 65535
      %v1007 = vshra.s32 %v740, 16
      %v1008 = vcvt.s32.f32 %v1006
      %v1009 = vcvt.s32.f32 %v1007
      %1010 = vmin.xlane.f32.xlu0 %v1009
      %v1011 = vpop.xlane.xlu0 %1010
      %vm1012 = vcmp.eq.f32.partialorder %v1009, %v1011
      %v1013 = vsel %vm1012, %v1008, inf
      %1014 = vmin.xlane.f32.xlu0 %v1013
      %v1015 = vpop.xlane.xlu0 %1014
      %v1016 = vcvt.f32.s32 %v1015
      %v1017 = vcvt.f32.s32 %v1011
      %v1018 = vshll.u32 %v1017, 16
      %v1019 = vadd.s32 %v1018, %v1016
      %v1020 = vand.u32 %v741, 65535
      %v1021 = vshra.s32 %v741, 16
      %v1022 = vcvt.s32.f32 %v1020
      %v1023 = vcvt.s32.f32 %v1021
      %1024 = vmin.xlane.f32.xlu0 %v1023
      %v1025 = vpop.xlane.xlu0 %1024
      %vm1026 = vcmp.eq.f32.partialorder %v1023, %v1025
      %v1027 = vsel %vm1026, %v1022, inf
      %1028 = vmin.xlane.f32.xlu0 %v1027
      %v1029 = vpop.xlane.xlu0 %1028
      %v1030 = vcvt.f32.s32 %v1029
      %v1031 = vcvt.f32.s32 %v1025
      %v1032 = vshll.u32 %v1031, 16
      %v1033 = vadd.s32 %v1032, %v1030
      %v1034 = vand.u32 %v742, 65535
      %v1035 = vshra.s32 %v742, 16
      %v1036 = vcvt.s32.f32 %v1034
      %v1037 = vcvt.s32.f32 %v1035
      %1038 = vmin.xlane.f32.xlu0 %v1037
      %v1039 = vpop.xlane.xlu0 %1038
      %vm1040 = vcmp.eq.f32.partialorder %v1037, %v1039
      %v1041 = vsel %vm1040, %v1036, inf
      %1042 = vmin.xlane.f32.xlu0 %v1041
      %v1043 = vpop.xlane.xlu0 %1042
      %v1044 = vcvt.f32.s32 %v1043
      %v1045 = vcvt.f32.s32 %v1039
      %v1046 = vshll.u32 %v1045, 16
      %v1047 = vadd.s32 %v1046, %v1044
      %v1048 = vand.u32 %v743, 65535
      %v1049 = vshra.s32 %v743, 16
      %v1050 = vcvt.s32.f32 %v1048
      %v1051 = vcvt.s32.f32 %v1049
      %1052 = vmin.xlane.f32.xlu0 %v1051
      %v1053 = vpop.xlane.xlu0 %1052
      %vm1054 = vcmp.eq.f32.partialorder %v1051, %v1053
      %v1055 = vsel %vm1054, %v1050, inf
      %1056 = vmin.xlane.f32.xlu0 %v1055
      %v1057 = vpop.xlane.xlu0 %1056
      %v1058 = vcvt.f32.s32 %v1057
      %v1059 = vcvt.f32.s32 %v1053
      %v1060 = vshll.u32 %v1059, 16
      %v1061 = vadd.s32 %v1060, %v1058
      %v1062 = vand.u32 %v744, 65535
      %v1063 = vshra.s32 %v744, 16
      %v1064 = vcvt.s32.f32 %v1062
      %v1065 = vcvt.s32.f32 %v1063
      %1066 = vmin.xlane.f32.xlu0 %v1065
      %v1067 = vpop.xlane.xlu0 %1066
      %vm1068 = vcmp.eq.f32.partialorder %v1065, %v1067
      %v1069 = vsel %vm1068, %v1064, inf
      %1070 = vmin.xlane.f32.xlu0 %v1069
      %v1071 = vpop.xlane.xlu0 %1070
      %v1072 = vcvt.f32.s32 %v1071
      %v1073 = vcvt.f32.s32 %v1067
      %v1074 = vshll.u32 %v1073, 16
      %v1075 = vadd.s32 %v1074, %v1072
      %v1076 = vand.u32 %v745, 65535
      %v1077 = vshra.s32 %v745, 16
      %v1078 = vcvt.s32.f32 %v1076
      %v1079 = vcvt.s32.f32 %v1077
      %1080 = vmin.xlane.f32.xlu0 %v1079
      %v1081 = vpop.xlane.xlu0 %1080
      %vm1082 = vcmp.eq.f32.partialorder %v1079, %v1081
      %v1083 = vsel %vm1082, %v1078, inf
      %1084 = vmin.xlane.f32.xlu0 %v1083
      %v1085 = vpop.xlane.xlu0 %1084
      %v1086 = vcvt.f32.s32 %v1085
      %v1087 = vcvt.f32.s32 %v1081
      %v1088 = vshll.u32 %v1087, 16
      %v1089 = vadd.s32 %v1088, %v1086
      %v1090 = vand.u32 %v746, 65535
      %v1091 = vshra.s32 %v746, 16
      %v1092 = vcvt.s32.f32 %v1090
      %v1093 = vcvt.s32.f32 %v1091
      %1094 = vmin.xlane.f32.xlu0 %v1093
      %v1095 = vpop.xlane.xlu0 %1094
      %vm1096 = vcmp.eq.f32.partialorder %v1093, %v1095
      %v1097 = vsel %vm1096, %v1092, inf
      %1098 = vmin.xlane.f32.xlu0 %v1097
      %v1099 = vpop.xlane.xlu0 %1098
      %v1100 = vcvt.f32.s32 %v1099
      %v1101 = vcvt.f32.s32 %v1095
      %v1102 = vshll.u32 %v1101, 16
      %v1103 = vadd.s32 %v1102, %v1100
      %v1104 = vand.u32 %v747, 65535
      %v1105 = vshra.s32 %v747, 16
      %v1106 = vcvt.s32.f32 %v1104
      %v1107 = vcvt.s32.f32 %v1105
      %1108 = vmin.xlane.f32.xlu0 %v1107
      %v1109 = vpop.xlane.xlu0 %1108
      %vm1110 = vcmp.eq.f32.partialorder %v1107, %v1109
      %v1111 = vsel %vm1110, %v1106, inf
      %1112 = vmin.xlane.f32.xlu0 %v1111
      %v1113 = vpop.xlane.xlu0 %1112
      %v1114 = vcvt.f32.s32 %v1113
      %v1115 = vcvt.f32.s32 %v1109
      %v1116 = vshll.u32 %v1115, 16
      %v1117 = vadd.s32 %v1116, %v1114
      %v1118 = vand.u32 %v748, 65535
      %v1119 = vshra.s32 %v748, 16
      %v1120 = vcvt.s32.f32 %v1118
      %v1121 = vcvt.s32.f32 %v1119
      %1122 = vmin.xlane.f32.xlu0 %v1121
      %v1123 = vpop.xlane.xlu0 %1122
      %vm1124 = vcmp.eq.f32.partialorder %v1121, %v1123
      %v1125 = vsel %vm1124, %v1120, inf
      %1126 = vmin.xlane.f32.xlu0 %v1125
      %v1127 = vpop.xlane.xlu0 %1126
      %v1128 = vcvt.f32.s32 %v1127
      %v1129 = vcvt.f32.s32 %v1123
      %v1130 = vshll.u32 %v1129, 16
      %v1131 = vadd.s32 %v1130, %v1128
      %v1132 = vand.u32 %v749, 65535
      %v1133 = vshra.s32 %v749, 16
      %v1134 = vcvt.s32.f32 %v1132
      %v1135 = vcvt.s32.f32 %v1133
      %1136 = vmin.xlane.f32.xlu0 %v1135
      %v1137 = vpop.xlane.xlu0 %1136
      %vm1138 = vcmp.eq.f32.partialorder %v1135, %v1137
      %v1139 = vsel %vm1138, %v1134, inf
      %1140 = vmin.xlane.f32.xlu0 %v1139
      %v1141 = vpop.xlane.xlu0 %1140
      %v1142 = vcvt.f32.s32 %v1141
      %v1143 = vcvt.f32.s32 %v1137
      %v1144 = vshll.u32 %v1143, 16
      %v1145 = vadd.s32 %v1144, %v1142
      %v1146 = vand.u32 %v750, 65535
      %v1147 = vshra.s32 %v750, 16
      %v1148 = vcvt.s32.f32 %v1146
      %v1149 = vcvt.s32.f32 %v1147
      %1150 = vmin.xlane.f32.xlu0 %v1149
      %v1151 = vpop.xlane.xlu0 %1150
      %vm1152 = vcmp.eq.f32.partialorder %v1149, %v1151
      %v1153 = vsel %vm1152, %v1148, inf
      %1154 = vmin.xlane.f32.xlu0 %v1153
      %v1155 = vpop.xlane.xlu0 %1154
      %v1156 = vcvt.f32.s32 %v1155
      %v1157 = vcvt.f32.s32 %v1151
      %v1158 = vshll.u32 %v1157, 16
      %v1159 = vadd.s32 %v1158, %v1156
      %v1160 = vand.u32 %v751, 65535
      %v1161 = vshra.s32 %v751, 16
      %v1162 = vcvt.s32.f32 %v1160
      %v1163 = vcvt.s32.f32 %v1161
      %1164 = vmin.xlane.f32.xlu0 %v1163
      %v1165 = vpop.xlane.xlu0 %1164
      %vm1166 = vcmp.eq.f32.partialorder %v1163, %v1165
      %v1167 = vsel %vm1166, %v1162, inf
      %1168 = vmin.xlane.f32.xlu0 %v1167
      %v1169 = vpop.xlane.xlu0 %1168
      %v1170 = vcvt.f32.s32 %v1169
      %v1171 = vcvt.f32.s32 %v1165
      %v1172 = vshll.u32 %v1171, 16
      %v1173 = vadd.s32 %v1172, %v1170
      %v1174 = vand.u32 %v752, 65535
      %v1175 = vshra.s32 %v752, 16
      %v1176 = vcvt.s32.f32 %v1174
      %v1177 = vcvt.s32.f32 %v1175
      %1178 = vmin.xlane.f32.xlu0 %v1177
      %v1179 = vpop.xlane.xlu0 %1178
      %vm1180 = vcmp.eq.f32.partialorder %v1177, %v1179
      %v1181 = vsel %vm1180, %v1176, inf
      %1182 = vmin.xlane.f32.xlu0 %v1181
      %v1183 = vpop.xlane.xlu0 %1182
      %v1184 = vcvt.f32.s32 %v1183
      %v1185 = vcvt.f32.s32 %v1179
      %v1186 = vshll.u32 %v1185, 16
      %v1187 = vadd.s32 %v1186, %v1184
      %v1188 = vand.u32 %v753, 65535
      %v1189 = vshra.s32 %v753, 16
      %v1190 = vcvt.s32.f32 %v1188
      %v1191 = vcvt.s32.f32 %v1189
      %1192 = vmin.xlane.f32.xlu0 %v1191
      %v1193 = vpop.xlane.xlu0 %1192
      %vm1194 = vcmp.eq.f32.partialorder %v1191, %v1193
      %v1195 = vsel %vm1194, %v1190, inf
      %1196 = vmin.xlane.f32.xlu0 %v1195
      %v1197 = vpop.xlane.xlu0 %1196
      %v1198 = vcvt.f32.s32 %v1197
      %v1199 = vcvt.f32.s32 %v1193
      %v1200 = vshll.u32 %v1199, 16
      %v1201 = vadd.s32 %v1200, %v1198
      %vm1202 = vcmp.eq.s32.totalorder %v689, %v767
      %vm1203 = vcmp.eq.s32.totalorder %v689, %v781
      %vm1204 = vcmp.eq.s32.totalorder %v689, %v795
      %vm1205 = vcmp.eq.s32.totalorder %v689, %v809
      %vm1206 = vcmp.eq.s32.totalorder %v689, %v823
      %vm1207 = vcmp.eq.s32.totalorder %v689, %v837
      %vm1208 = vcmp.eq.s32.totalorder %v689, %v851
      %vm1209 = vcmp.eq.s32.totalorder %v689, %v865
      %vm1210 = vcmp.eq.s32.totalorder %v689, %v879
      %vm1211 = vcmp.eq.s32.totalorder %v689, %v893
      %vm1212 = vcmp.eq.s32.totalorder %v689, %v907
      %vm1213 = vcmp.eq.s32.totalorder %v689, %v921
      %vm1214 = vcmp.eq.s32.totalorder %v689, %v935
      %vm1215 = vcmp.eq.s32.totalorder %v689, %v949
      %vm1216 = vcmp.eq.s32.totalorder %v689, %v963
      %vm1217 = vcmp.eq.s32.totalorder %v689, %v977
      %vm1218 = vcmp.eq.s32.totalorder %v689, %v991
      %vm1219 = vcmp.eq.s32.totalorder %v689, %v1005
      %vm1220 = vcmp.eq.s32.totalorder %v689, %v1019
      %vm1221 = vcmp.eq.s32.totalorder %v689, %v1033
      %vm1222 = vcmp.eq.s32.totalorder %v689, %v1047
      %vm1223 = vcmp.eq.s32.totalorder %v689, %v1061
      %vm1224 = vcmp.eq.s32.totalorder %v689, %v1075
      %vm1225 = vcmp.eq.s32.totalorder %v689, %v1089
      %vm1226 = vcmp.eq.s32.totalorder %v689, %v1103
      %vm1227 = vcmp.eq.s32.totalorder %v689, %v1117
      %vm1228 = vcmp.eq.s32.totalorder %v689, %v1131
      %vm1229 = vcmp.eq.s32.totalorder %v689, %v1145
      %vm1230 = vcmp.eq.s32.totalorder %v689, %v1159
      %vm1231 = vcmp.eq.s32.totalorder %v689, %v1173
      %vm1232 = vcmp.eq.s32.totalorder %v689, %v1187
      %vm1233 = vcmp.eq.s32.totalorder %v689, %v1201
      %v1234 = vsel %vm1202, 1, 0
      %v1235 = vsel %vm1203, 1, 0
      %v1236 = vsel %vm1204, 1, 0
      %v1237 = vsel %vm1205, 1, 0
      %v1238 = vsel %vm1206, 1, 0
      %v1239 = vsel %vm1207, 1, 0
      %v1240 = vsel %vm1208, 1, 0
      %v1241 = vsel %vm1209, 1, 0
      %v1242 = vsel %vm1210, 1, 0
      %v1243 = vsel %vm1211, 1, 0
      %v1244 = vsel %vm1212, 1, 0
      %v1245 = vsel %vm1213, 1, 0
      %v1246 = vsel %vm1214, 1, 0
      %v1247 = vsel %vm1215, 1, 0
      %v1248 = vsel %vm1216, 1, 0
      %v1249 = vsel %vm1217, 1, 0
      %v1250 = vsel %vm1218, 1, 0
      %v1251 = vsel %vm1219, 1, 0
      %v1252 = vsel %vm1220, 1, 0
      %v1253 = vsel %vm1221, 1, 0
      %v1254 = vsel %vm1222, 1, 0
      %v1255 = vsel %vm1223, 1, 0
      %v1256 = vsel %vm1224, 1, 0
      %v1257 = vsel %vm1225, 1, 0
      %v1258 = vsel %vm1226, 1, 0
      %v1259 = vsel %vm1227, 1, 0
      %v1260 = vsel %vm1228, 1, 0
      %v1261 = vsel %vm1229, 1, 0
      %v1262 = vsel %vm1230, 1, 0
      %v1263 = vsel %vm1231, 1, 0
      %v1264 = vsel %vm1232, 1, 0
      %v1265 = vsel %vm1233, 1, 0
      %v1266 = vcvt.s32.f32 %v1234
      %v1267 = vcvt.s32.f32 %v1235
      %v1268 = vcvt.s32.f32 %v1236
      %v1269 = vcvt.s32.f32 %v1237
      %v1270 = vcvt.s32.f32 %v1238
      %v1271 = vcvt.s32.f32 %v1239
      %v1272 = vcvt.s32.f32 %v1240
      %v1273 = vcvt.s32.f32 %v1241
      %v1274 = vcvt.s32.f32 %v1242
      %v1275 = vcvt.s32.f32 %v1243
      %v1276 = vcvt.s32.f32 %v1244
      %v1277 = vcvt.s32.f32 %v1245
      %v1278 = vcvt.s32.f32 %v1246
      %v1279 = vcvt.s32.f32 %v1247
      %v1280 = vcvt.s32.f32 %v1248
      %v1281 = vcvt.s32.f32 %v1249
      %v1282 = vcvt.s32.f32 %v1250
      %v1283 = vcvt.s32.f32 %v1251
      %v1284 = vcvt.s32.f32 %v1252
      %v1285 = vcvt.s32.f32 %v1253
      %v1286 = vcvt.s32.f32 %v1254
      %v1287 = vcvt.s32.f32 %v1255
      %v1288 = vcvt.s32.f32 %v1256
      %v1289 = vcvt.s32.f32 %v1257
      %v1290 = vcvt.s32.f32 %v1258
      %v1291 = vcvt.s32.f32 %v1259
      %v1292 = vcvt.s32.f32 %v1260
      %v1293 = vcvt.s32.f32 %v1261
      %v1294 = vcvt.s32.f32 %v1262
      %v1295 = vcvt.s32.f32 %v1263
      %v1296 = vcvt.s32.f32 %v1264
      %v1297 = vcvt.s32.f32 %v1265
      %1298 = vmatpush.msra.mxu0 %v297
      %1299 = vmatpush.msra.mxu0 %v296
      %1300 = vmatpush.msra.mxu0 %v295
      %1301 = vmatpush.msra.mxu0 %v294
      %1302 = vmatpush.msra.mxu0 %v293
      %1303 = vmatpush.msra.mxu0 %v292
      %1304 = vmatpush.msra.mxu0 %v291
      %1305 = vmatpush.msra.mxu0 %v290
      %1306 = vmatpush.msra.mxu0 %v289
      %1307 = vmatpush.msra.mxu0 %v288
      %1308 = vmatpush.msra.mxu0 %v287
      %1309 = vmatpush.msra.mxu0 %v286
      %1310 = vmatpush.msra.mxu0 %v285
      %1311 = vmatpush.msra.mxu0 %v284
      %1312 = vmatpush.msra.mxu0 %v283
      %1313 = vmatpush.msra.mxu0 %v282
      %1314 = vmatmul.f32.gmra.mxu0 %v1266
      %v1315 = vpop.f32.mrf.mxu0
      %v1316 = vadd.f32 0.0, %v1315
      %1317 = vmatmul.f32.gmra.mxu0 %v1267
      %v1318 = vpop.f32.mrf.mxu0
      %v1319 = vadd.f32 0.0, %v1318
      %1320 = vmatmul.f32.gmra.mxu0 %v1268
      %v1321 = vpop.f32.mrf.mxu0
      %v1322 = vadd.f32 0.0, %v1321
      %1323 = vmatmul.f32.gmra.mxu0 %v1269
      %v1324 = vpop.f32.mrf.mxu0
      %v1325 = vadd.f32 0.0, %v1324
      %1326 = vmatmul.f32.gmra.mxu0 %v1270
      %v1327 = vpop.f32.mrf.mxu0
      %v1328 = vadd.f32 0.0, %v1327
      %1329 = vmatmul.f32.gmra.mxu0 %v1271
      %v1330 = vpop.f32.mrf.mxu0
      %v1331 = vadd.f32 0.0, %v1330
      %1332 = vmatmul.f32.gmra.mxu0 %v1272
      %v1333 = vpop.f32.mrf.mxu0
      %v1334 = vadd.f32 0.0, %v1333
      %1335 = vmatmul.f32.gmra.mxu0 %v1273
      %v1336 = vpop.f32.mrf.mxu0
      %v1337 = vadd.f32 0.0, %v1336
      %1338 = vmatmul.f32.gmra.mxu0 %v1274
      %v1339 = vpop.f32.mrf.mxu0
      %v1340 = vadd.f32 0.0, %v1339
      %1341 = vmatmul.f32.gmra.mxu0 %v1275
      %v1342 = vpop.f32.mrf.mxu0
      %v1343 = vadd.f32 0.0, %v1342
      %1344 = vmatmul.f32.gmra.mxu0 %v1276
      %v1345 = vpop.f32.mrf.mxu0
      %v1346 = vadd.f32 0.0, %v1345
      %1347 = vmatmul.f32.gmra.mxu0 %v1277
      %v1348 = vpop.f32.mrf.mxu0
      %v1349 = vadd.f32 0.0, %v1348
      %1350 = vmatmul.f32.gmra.mxu0 %v1278
      %v1351 = vpop.f32.mrf.mxu0
      %v1352 = vadd.f32 0.0, %v1351
      %1353 = vmatmul.f32.gmra.mxu0 %v1279
      %v1354 = vpop.f32.mrf.mxu0
      %v1355 = vadd.f32 0.0, %v1354
      %1356 = vmatmul.f32.gmra.mxu0 %v1280
      %v1357 = vpop.f32.mrf.mxu0
      %v1358 = vadd.f32 0.0, %v1357
      %1359 = vmatmul.f32.gmra.mxu0 %v1281
      %v1360 = vpop.f32.mrf.mxu0
      %v1361 = vadd.f32 0.0, %v1360
      %1362 = vmatmul.f32.gmra.mxu0 %v1282
      %v1363 = vpop.f32.mrf.mxu0
      %v1364 = vadd.f32 0.0, %v1363
      %1365 = vmatmul.f32.gmra.mxu0 %v1283
      %v1366 = vpop.f32.mrf.mxu0
      %v1367 = vadd.f32 0.0, %v1366
      %1368 = vmatmul.f32.gmra.mxu0 %v1284
      %v1369 = vpop.f32.mrf.mxu0
      %v1370 = vadd.f32 0.0, %v1369
      %1371 = vmatmul.f32.gmra.mxu0 %v1285
      %v1372 = vpop.f32.mrf.mxu0
      %v1373 = vadd.f32 0.0, %v1372
      %1374 = vmatmul.f32.gmra.mxu0 %v1286
      %v1375 = vpop.f32.mrf.mxu0
      %v1376 = vadd.f32 0.0, %v1375
      %1377 = vmatmul.f32.gmra.mxu0 %v1287
      %v1378 = vpop.f32.mrf.mxu0
      %v1379 = vadd.f32 0.0, %v1378
      %1380 = vmatmul.f32.gmra.mxu0 %v1288
      %v1381 = vpop.f32.mrf.mxu0
      %v1382 = vadd.f32 0.0, %v1381
      %1383 = vmatmul.f32.gmra.mxu0 %v1289
      %v1384 = vpop.f32.mrf.mxu0
      %v1385 = vadd.f32 0.0, %v1384
      %1386 = vmatmul.f32.gmra.mxu0 %v1290
      %v1387 = vpop.f32.mrf.mxu0
      %v1388 = vadd.f32 0.0, %v1387
      %1389 = vmatmul.f32.gmra.mxu0 %v1291
      %v1390 = vpop.f32.mrf.mxu0
      %v1391 = vadd.f32 0.0, %v1390
      %1392 = vmatmul.f32.gmra.mxu0 %v1292
      %v1393 = vpop.f32.mrf.mxu0
      %v1394 = vadd.f32 0.0, %v1393
      %1395 = vmatmul.f32.gmra.mxu0 %v1293
      %v1396 = vpop.f32.mrf.mxu0
      %v1397 = vadd.f32 0.0, %v1396
      %1398 = vmatmul.f32.gmra.mxu0 %v1294
      %v1399 = vpop.f32.mrf.mxu0
      %v1400 = vadd.f32 0.0, %v1399
      %1401 = vmatmul.f32.gmra.mxu0 %v1295
      %v1402 = vpop.f32.mrf.mxu0
      %v1403 = vadd.f32 0.0, %v1402
      %1404 = vmatmul.f32.gmra.mxu0 %v1296
      %v1405 = vpop.f32.mrf.mxu0
      %v1406 = vadd.f32 0.0, %v1405
      %1407 = vmatmul.f32.gmra.mxu0 %v1297
      %v1408 = vpop.f32.mrf.mxu0
      %v1409 = vadd.f32 0.0, %v1408
      %1410 = vdwg.mxu0
      %v1411 = vsub.f32 %v1316, %v234
      %v1412 = vsub.f32 %v1319, %v235
      %v1413 = vsub.f32 %v1322, %v236
      %v1414 = vsub.f32 %v1325, %v237
      %v1415 = vsub.f32 %v1328, %v238
      %v1416 = vsub.f32 %v1331, %v239
      %v1417 = vsub.f32 %v1334, %v240
      %v1418 = vsub.f32 %v1337, %v241
      %v1419 = vsub.f32 %v1340, %v242
      %v1420 = vsub.f32 %v1343, %v243
      %v1421 = vsub.f32 %v1346, %v244
      %v1422 = vsub.f32 %v1349, %v245
      %v1423 = vsub.f32 %v1352, %v246
      %v1424 = vsub.f32 %v1355, %v247
      %v1425 = vsub.f32 %v1358, %v248
      %v1426 = vsub.f32 %v1361, %v249
      %v1427 = vsub.f32 %v1364, %v266
      %v1428 = vsub.f32 %v1367, %v267
      %v1429 = vsub.f32 %v1370, %v268
      %v1430 = vsub.f32 %v1373, %v269
      %v1431 = vsub.f32 %v1376, %v270
      %v1432 = vsub.f32 %v1379, %v271
      %v1433 = vsub.f32 %v1382, %v272
      %v1434 = vsub.f32 %v1385, %v273
      %v1435 = vsub.f32 %v1388, %v274
      %v1436 = vsub.f32 %v1391, %v275
      %v1437 = vsub.f32 %v1394, %v276
      %v1438 = vsub.f32 %v1397, %v277
      %v1439 = vsub.f32 %v1400, %v278
      %v1440 = vsub.f32 %v1403, %v279
      %v1441 = vsub.f32 %v1406, %v280
      %v1442 = vsub.f32 %v1409, %v281
      %v1443 = vadd.f32 %v234, %v1411
      %v1444 = vadd.f32 %v235, %v1412
      %v1445 = vadd.f32 %v236, %v1413
      %v1446 = vadd.f32 %v237, %v1414
      %v1447 = vadd.f32 %v238, %v1415
      %v1448 = vadd.f32 %v239, %v1416
      %v1449 = vadd.f32 %v240, %v1417
      %v1450 = vadd.f32 %v241, %v1418
      %v1451 = vadd.f32 %v242, %v1419
      %v1452 = vadd.f32 %v243, %v1420
      %v1453 = vadd.f32 %v244, %v1421
      %v1454 = vadd.f32 %v245, %v1422
      %v1455 = vadd.f32 %v246, %v1423
      %v1456 = vadd.f32 %v247, %v1424
      %v1457 = vadd.f32 %v248, %v1425
      %v1458 = vadd.f32 %v249, %v1426
      %v1459 = vadd.f32 %v266, %v1427
      %v1460 = vadd.f32 %v267, %v1428
      %v1461 = vadd.f32 %v268, %v1429
      %v1462 = vadd.f32 %v269, %v1430
      %v1463 = vadd.f32 %v270, %v1431
      %v1464 = vadd.f32 %v271, %v1432
      %v1465 = vadd.f32 %v272, %v1433
      %v1466 = vadd.f32 %v273, %v1434
      %v1467 = vadd.f32 %v274, %v1435
      %v1468 = vadd.f32 %v275, %v1436
      %v1469 = vadd.f32 %v276, %v1437
      %v1470 = vadd.f32 %v277, %v1438
      %v1471 = vadd.f32 %v278, %v1439
      %v1472 = vadd.f32 %v279, %v1440
      %v1473 = vadd.f32 %v280, %v1441
      %v1474 = vadd.f32 %v281, %v1442
      %1475 = vst.msk [vmem:[%s208] sm:$0xff] %vm298, %v1443
      %1476 = vst.msk [vmem:[%s208 + $0x8] sm:$0xff] %vm298, %v1444
      %1477 = vst.msk [vmem:[%s208 + $0x10] sm:$0xff] %vm298, %v1445
      %1478 = vst.msk [vmem:[%s208 + $0x18] sm:$0xff] %vm298, %v1446
      %1479 = vst.msk [vmem:[%s208 + $0x20] sm:$0xff] %vm298, %v1447
      %1480 = vst.msk [vmem:[%s208 + $0x28] sm:$0xff] %vm298, %v1448
      %1481 = vst.msk [vmem:[%s208 + $0x30] sm:$0xff] %vm298, %v1449
      %1482 = vst.msk [vmem:[%s208 + $0x38] sm:$0xff] %vm298, %v1450
      %1483 = vst.msk [vmem:[%s208 + $0x40] sm:$0xff] %vm298, %v1451
      %1484 = vst.msk [vmem:[%s208 + $0x48] sm:$0xff] %vm298, %v1452
      %1485 = vst.msk [vmem:[%s208 + $0x50] sm:$0xff] %vm298, %v1453
      %1486 = vst.msk [vmem:[%s208 + $0x58] sm:$0xff] %vm298, %v1454
      %1487 = vst.msk [vmem:[%s208 + $0x60] sm:$0xff] %vm298, %v1455
      %1488 = vst.msk [vmem:[%s208 + $0x68] sm:$0xff] %vm298, %v1456
      %1489 = vst.msk [vmem:[%s208 + $0x70] sm:$0xff] %vm298, %v1457
      %1490 = vst.msk [vmem:[%s208 + $0x78] sm:$0xff] %vm298, %v1458
      %1491 = vst.msk [vmem:[%s208 + $0x80] sm:$0xff] %vm298, %v1459
      %1492 = vst.msk [vmem:[%s208 + $0x88] sm:$0xff] %vm298, %v1460
      %1493 = vst.msk [vmem:[%s208 + $0x90] sm:$0xff] %vm298, %v1461
      %1494 = vst.msk [vmem:[%s208 + $0x98] sm:$0xff] %vm298, %v1462
      %1495 = vst.msk [vmem:[%s208 + $0xa0] sm:$0xff] %vm298, %v1463
      %1496 = vst.msk [vmem:[%s208 + $0xa8] sm:$0xff] %vm298, %v1464
      %1497 = vst.msk [vmem:[%s208 + $0xb0] sm:$0xff] %vm298, %v1465
      %1498 = vst.msk [vmem:[%s208 + $0xb8] sm:$0xff] %vm298, %v1466
      %1499 = vst.msk [vmem:[%s208 + $0xc0] sm:$0xff] %vm298, %v1467
      %1500 = vst.msk [vmem:[%s208 + $0xc8] sm:$0xff] %vm298, %v1468
      %1501 = vst.msk [vmem:[%s208 + $0xd0] sm:$0xff] %vm298, %v1469
      %1502 = vst.msk [vmem:[%s208 + $0xd8] sm:$0xff] %vm298, %v1470
      %1503 = vst.msk [vmem:[%s208 + $0xe0] sm:$0xff] %vm298, %v1471
      %1504 = vst.msk [vmem:[%s208 + $0xe8] sm:$0xff] %vm298, %v1472
      %1505 = vst.msk [vmem:[%s208 + $0xf0] sm:$0xff] %vm298, %v1473
      %1506 = vst.msk [vmem:[%s208 + $0xf8] sm:$0xff] %vm298, %v1474
      %s1507 = smul.u32 32, %s19
      %p1508 = scmp.lt.s32.totalorder %s18, 1
      %s1509 = scalar_select %p1508, %s18, 1
      %p1510 = scmp.lt.s32.totalorder %s1507, 31
      %s1511 = scalar_select %p1510, %s1507, 31
      %s1512 = smul.addr %s1509, 32
      %s1513 = sadd.s32 %s1511, %s1512
      %s1514 = smul.addr %s1513, 8
      %s1515 = scalar_lea.vmem %s3, %s1514
      // Predicated region
      $region33: #{vector_quantize.1} parent=31 // pred_check
        %p1516 = pneg %p116
      $region34: #{vector_quantize.1} parent=31 // pred_check_branch
        %1518 = sbr.rel (%p1516) target = $region36
      $region35: #{vector_quantize.1} parent=31 // pred_region
        %s1519 = smul.u32 32, %s19
      $region36: #{vector_quantize.1} parent=31 // pred_fallthru
        _
    $region32: #{vector_quantize.1} parent=5 // pred_fallthru
      _
    %p1520 = scmp.le.s32.totalorder 2, %s9
    // Predicated region
    $region37: #{vector_quantize.1} parent=5 // pred_check
      %p1521 = pneg %p1520
    $region38: #{vector_quantize.1} parent=5 // pred_check_branch
      %1523 = sbr.rel (%p1521) target = $region40
    $region39: #{vector_quantize.1} parent=5 // pred_region
      %s1524 = ssub.s32 %s9, 2
      // Predicated region
      $region41: #{vector_quantize.1} parent=39 // pred_check
        %p1525 = pneg %p122
      $region42: #{vector_quantize.1} parent=39 // pred_check_branch
        %1527 = sbr.rel (%p1525) target = $region44
      $region43: #{vector_quantize.1} parent=39 // pred_region
        %s1528 = smul.u32 32, %s21
        %p1529 = scmp.lt.s32.totalorder %s20, 1
        %s1530 = scalar_select %p1529, %s20, 1
        %p1531 = scmp.lt.s32.totalorder %s1528, 31
        %s1532 = scalar_select %p1531, %s1528, 31
        %s1533 = smul.addr %s1530, 32
        %s1534 = sadd.s32 %s1532, %s1533
        %s1535 = smul.addr %s1534, 8
        %s1536 = scalar_lea.vmem %s3, %s1535
      $region44: #{vector_quantize.1} parent=39 // pred_fallthru
        _
    $region40: #{vector_quantize.1} parent=5 // pred_fallthru
      _
  $region6: #{vector_quantize.1} parent=0 // loop_footer
    %s13 = sadd.s32 1, %s9
  $region7: #{vector_quantize.1} parent=0 // loop_footer_branch
    %8 = sbr.rel target = $region3
  $region8: #{vector_quantize.1} parent=0 // loop_exit
    _

</llo_original>
